<compile_context>
chip_gen: v5e
topology: v5e:2x2
jax: 0.10.0
libtpu: 0.0.40
codegen_flags: <defaults>
</compile_context>

<pallas_src>
import functools

import jax
import jax.numpy as jnp
from jax import lax
from jax.experimental import pallas as pl
from jax.experimental.pallas import tpu as pltpu

ALPHA = 1.0
GAMMA = 2.0
XENT = 0.1
COS_EPS = 1e-8    # torch cosine_similarity eps
NORM_EPS = 1e-12  # torch F.normalize eps

_LANE = 128
_TEMPS_F32 = 8                      # rough count of (tile_n, C) f32 temporaries
_VMEM_CAP_FALLBACK = 48 * 1024 * 1024   # stays well under v7x's 64 MiB/core


def _sublane_multiple(dtype) -> int:
    # Native sublane tile: f32 -> 8 rows, bf16/f16 -> 16, int8/fp8 -> 32.
    return max(8, 32 // jnp.dtype(dtype).itemsize)


def _vmem_cap_bytes() -> int:
    try:
        phys = int(pltpu.get_tpu_info().vmem_capacity_bytes)
        return max(16 * 1024 * 1024, min((phys * 3) // 4, 96 * 1024 * 1024))
    except Exception:  # pragma: no cover - info query unavailable
        return _VMEM_CAP_FALLBACK


def _per_row_bytes(c_pad: int, itemsize: int) -> int:
    # double-buffered logits rows + in-body f32 temps + double-buffered targets
    return c_pad * (2 * itemsize + _TEMPS_F32 * 4) + 2 * _LANE * 4


def _choose_tile_n(n, c, dtype, tile_n, cap):
    sub = _sublane_multiple(dtype)
    c_pad = max(_LANE, ((c + _LANE - 1) // _LANE) * _LANE)
    itemsize = jnp.dtype(dtype).itemsize
    if tile_n is None:
        budget = min(24 * 1024 * 1024, (cap * 3) // 4)
        tile_n = budget // _per_row_bytes(c_pad, itemsize)
        tile_n = min(max(tile_n, sub), 2048)
    if tile_n >= n:
        return n                        # single tile: full-array block is legal
    return max(sub, (int(tile_n) // sub) * sub)


def _vmem_limit_bytes(tile_n, c, dtype, cap):
    c_pad = max(_LANE, ((c + _LANE - 1) // _LANE) * _LANE)
    tile_pad = ((tile_n + 7) // 8) * 8
    need = tile_pad * _per_row_bytes(c_pad, jnp.dtype(dtype).itemsize)
    need += 2 * 8 * _LANE * 4           # double-buffered (8,128) output block
    need += 8 * _LANE * 4               # (1,1) scratch padded to one vreg
    need += 2 * 1024 * 1024             # headroom
    return int(min(max(need, 4 * 1024 * 1024), cap))


def _focal_cosine_kernel(x_ref, t_ref, o_ref, acc_ref, *,
                         alpha, gamma, xent, n_total, tile_n, inner_tiles):
    p = pl.program_id(0)                 # batch shard (megacore parallel axis)
    i = pl.program_id(1)                 # batch-tile reduction axis

    @pl.when(i == 0)
    def _():
        acc_ref[...] = jnp.zeros_like(acc_ref)

    x = x_ref[...].astype(jnp.float32)   # (TILE_N, C)
    t = t_ref[...]                       # (TILE_N, 1) int32
    tn, c = x.shape

    # Target logit x[i, t_i] via iota-compare (no gather, no float one-hot).
    col = lax.broadcasted_iota(jnp.int32, (tn, c), 1)
    x_t = jnp.sum(jnp.where(col == t, x, 0.0), axis=-1, keepdims=True)

    x_norm = jnp.sqrt(jnp.sum(x * x, axis=-1, keepdims=True))

    # ---- cosine embedding loss (y = +1, ||onehot|| = 1) ----
    cos_row = 1.0 - x_t / jnp.maximum(x_norm, COS_EPS)            # (TILE_N, 1)

    # ---- cross entropy on L2-normalized logits ----
    inv_norm = 1.0 / jnp.maximum(x_norm, NORM_EPS)                # F.normalize
    xn = x * inv_norm
    # |xn| <= 1 after L2 normalization, so exp() cannot overflow: the usual
    # softmax max-subtraction is intentionally omitted.  Do NOT reuse this
    # cross-entropy without the normalization step.
    lse = jnp.log(jnp.sum(jnp.exp(xn), axis=-1, keepdims=True))
    cent = lse - x_t * inv_norm                                   # -log p_t

    # ---- focal term ----
    pt = jnp.exp(-cent)
    one_minus_pt = 1.0 - pt
    g = float(gamma)
    if g == int(g) and g >= 0:
        focal_w = jnp.ones_like(one_minus_pt)
        for _ in range(int(g)):          # gamma=2 -> single multiply
            focal_w = focal_w * one_minus_pt
    else:
        focal_w = one_minus_pt ** g      # non-integer gamma fallback
    focal_row = alpha * focal_w * cent                             # (TILE_N, 1)

    # Mask rows beyond the true batch size (partial / duplicated edge tiles).
    blk = p * inner_tiles + i
    row = blk * tile_n + lax.broadcasted_iota(jnp.int32, (tn, 1), 0)
    valid = row < n_total
    contrib = jnp.where(valid, cos_row + xent * focal_row, 0.0)

    # Fused accumulator: mean(cos) + xent*mean(focal) == mean(cos + xent*focal).
    acc_ref[...] += jnp.sum(contrib, axis=0, keepdims=True)

    @pl.when(i == pl.num_programs(1) - 1)
    def _():
        # Lane-dense (8,128) store of this core's partial mean.
        o_ref[...] = jnp.broadcast_to(acc_ref[...] * (1.0 / float(n_total)),
                                      o_ref.shape)


def focal_cosine_loss(logits, target, *, alpha=ALPHA, gamma=GAMMA, xent=XENT,
                      tile_n=None):
    """logits: (N, C) float (f32 or bf16); target: (N,) int. Scalar f32 loss."""
    n, c = logits.shape
    cap = _vmem_cap_bytes()
    tile_n = _choose_tile_n(n, c, logits.dtype, tile_n, cap)

    tiles_total = pl.cdiv(n, tile_n)
    num_par = 2 if tiles_total >= 2 else 1   # shard batch across v7x's 2 TCs
    inner_tiles = pl.cdiv(tiles_total, num_par)

    def in_map(p, i):
        blk = p * inner_tiles + i
        # Clamp so edge/overhang tiles re-read real (finite) data; the in-kernel
        # row mask zeroes their contribution.
        return (jnp.minimum(blk, tiles_total - 1), 0)

    t2d = target.astype(jnp.int32).reshape(n, 1)

    kernel = functools.partial(
        _focal_cosine_kernel,
        alpha=float(alpha), gamma=float(gamma), xent=float(xent),
        n_total=n, tile_n=tile_n, inner_tiles=inner_tiles)

    cost = pl.CostEstimate(
        flops=8 * n * c,
        transcendentals=n * c + 3 * n,
        bytes_accessed=int(n * c * logits.dtype.itemsize
                           + n * 4 + num_par * 8 * _LANE * 4),
    )

    out = pl.pallas_call(
        kernel,
        out_shape=jax.ShapeDtypeStruct((num_par * 8, _LANE), jnp.float32),
        grid_spec=pltpu.PrefetchScalarGridSpec(
            num_scalar_prefetch=0,
            grid=(num_par, inner_tiles),
            in_specs=[
                pl.BlockSpec((tile_n, c), in_map),
                pl.BlockSpec((tile_n, 1), in_map),
            ],
            out_specs=pl.BlockSpec((8, _LANE), lambda p, i: (p, 0)),
            scratch_shapes=[
                pltpu.VMEM((1, 1), jnp.float32),   # running sum of cos + xent*focal
            ],
        ),
        compiler_params=pltpu.CompilerParams(
            dimension_semantics=("parallel", "arbitrary"),
            vmem_limit_bytes=_vmem_limit_bytes(tile_n, c, logits.dtype, cap),
        ),
        cost_estimate=cost,
    )(logits, t2d)

    partials = out.reshape(num_par, 8, _LANE)[:, 0, 0]
    return jnp.sum(partials)


def _reference(logits, target, alpha=ALPHA, gamma=GAMMA, xent=XENT):
    x = logits.astype(jnp.float32)
    n, c = x.shape
    onehot = jax.nn.one_hot(target, c, dtype=jnp.float32)
    x_norm = jnp.sqrt(jnp.sum(x * x, axis=-1))
    cos = jnp.sum(x * onehot, axis=-1) / jnp.maximum(x_norm, COS_EPS)
    cosine_loss = jnp.mean(1.0 - cos)
    xn = x / jnp.maximum(x_norm, NORM_EPS)[:, None]
    logp = jax.nn.log_softmax(xn, axis=-1)
    cent = -jnp.sum(logp * onehot, axis=-1)
    pt = jnp.exp(-cent)
    focal = jnp.mean(alpha * (1.0 - pt) ** gamma * cent)
    return cosine_loss + xent * focal


if __name__ == "__main__":
    key = jax.random.PRNGKey(0)
    k1, k2, k3, k4, k5, k6 = jax.random.split(key, 6)

    # 1) small single-tile f32 path
    N, C = 8, 32
    logits = jax.random.normal(k1, (N, C), dtype=jnp.float32)
    target = jax.random.randint(k2, (N,), 0, C, dtype=jnp.int32)
    loss = focal_cosine_loss(logits, target)
    jax.block_until_ready(loss)
    ref = _reference(logits, target)
    assert jnp.allclose(loss, ref, rtol=1e-5, atol=1e-5), (loss, ref)

    # 2) multi-tile f32 path (partial last tile + 2-way parallel batch shard)
    N2, C2 = 40, 128
    logits2 = jax.random.normal(k3, (N2, C2), dtype=jnp.float32)
    target2 = jax.random.randint(k4, (N2,), 0, C2, dtype=jnp.int32)
    loss2 = focal_cosine_loss(logits2, target2, tile_n=16)
    jax.block_until_ready(loss2)
    ref2 = _reference(logits2, target2)
    assert jnp.allclose(loss2, ref2, rtol=1e-5, atol=1e-5), (loss2, ref2)

    # 3) bf16 input path (sublane multiple of 16), multi-tile + parallel shard
    N3, C3 = 48, 256
    logits3 = jax.random.normal(k5, (N3, C3), dtype=jnp.float32).astype(jnp.bfloat16)
    target3 = jax.random.randint(k6, (N3,), 0, C3, dtype=jnp.int32)
    loss3 = focal_cosine_loss(logits3, target3, tile_n=16)
    jax.block_until_ready(loss3)
    ref3 = _reference(logits3, target3)   # reference upcasts the same bf16 values
    assert jnp.allclose(loss3, ref3, rtol=1e-5, atol=1e-5), (loss3, ref3)

    print("KERNEL_OK")
</pallas_src>

<mosaic_0001>
module attributes {stable_mosaic.version = 11 : i64} {
  func.func @_focal_cosine_kernel(%arg0: i32, %arg1: i32, %arg2: memref<8x32xf32, #tpu.memory_space<vmem>>, %arg3: memref<8x1xi32, #tpu.memory_space<vmem>>, %arg4: memref<8x128xf32, #tpu.memory_space<vmem>>, %arg5: memref<1x1xf32, #tpu.memory_space<vmem>>) attributes {dimension_semantics = [#tpu.dimension_semantics<parallel>, #tpu.dimension_semantics<arbitrary>], iteration_bounds = array<i64: 1, 1>, scalar_prefetch = 0 : i64, scratch_operands = 1 : i64, tpu.core_type = #tpu.core_type<tc>, window_params = [{transform_indices = @transform_0, window_bounds = array<i64: 8, 32>}, {transform_indices = @transform_1, window_bounds = array<i64: 8, 1>}, {transform_indices = @transform_2, window_bounds = array<i64: 8, 128>}]} {
    %c0_i32 = arith.constant 0 : i32
    %0 = arith.cmpi eq, %arg1, %c0_i32 : i32
    %1 = arith.extui %0 : i1 to i32
    %c0_i32_0 = arith.constant 0 : i32
    %2 = arith.cmpi ne, %1, %c0_i32_0 : i32
    scf.if %2 {
      %cst_25 = arith.constant 0.000000e+00 : f32
      %65 = vector.broadcast %cst_25 : f32 to vector<1x1xf32>
      %c0_26 = arith.constant 0 : index
      %c0_27 = arith.constant 0 : index
      %66 = vector.load %arg5[%c0_26, %c0_27] : memref<1x1xf32, #tpu.memory_space<vmem>>, vector<1x1xf32>
      tpu.vector_store %arg5[%c0_26, %c0_27], %65 {strides = array<i32>} : memref<1x1xf32, #tpu.memory_space<vmem>>, vector<1x1xf32>,
    } else {
    }
    %c0 = arith.constant 0 : index
    %c0_1 = arith.constant 0 : index
    %3 = vector.load %arg2[%c0, %c0_1] : memref<8x32xf32, #tpu.memory_space<vmem>>, vector<8x32xf32>
    %c0_2 = arith.constant 0 : index
    %c0_3 = arith.constant 0 : index
    %4 = vector.load %arg3[%c0_2, %c0_3] : memref<8x1xi32, #tpu.memory_space<vmem>>, vector<8x1xi32>
    %5 = tpu.iota {dimensions = array<i32: 1>} : vector<8x32xi32>
    %6 = vector.broadcast %4 : vector<8x1xi32> to vector<8x32xi32>
    %7 = arith.cmpi eq, %5, %6 : vector<8x32xi32>
    %cst = arith.constant 0.000000e+00 : f32
    %8 = vector.broadcast %cst : f32 to vector<8x32xf32>
    %9 = arith.select %7, %3, %8 : vector<8x32xi1>, vector<8x32xf32>
    %cst_4 = arith.constant dense<0.000000e+00> : vector<8xf32>
    %10 = vector.multi_reduction <add>, %9, %cst_4 [1] : vector<8x32xf32> to vector<8xf32>
    %11 = vector.shape_cast %10 : vector<8xf32> to vector<8x1xf32>
    %12 = arith.mulf %3, %3 : vector<8x32xf32>
    %cst_5 = arith.constant dense<0.000000e+00> : vector<8xf32>
    %13 = vector.multi_reduction <add>, %12, %cst_5 [1] : vector<8x32xf32> to vector<8xf32>
    %14 = vector.shape_cast %13 : vector<8xf32> to vector<8x1xf32>
    %15 = math.sqrt %14 : vector<8x1xf32>
    %cst_6 = arith.constant 9.99999993E-9 : f32
    %16 = vector.broadcast %cst_6 : f32 to vector<8x1xf32>
    %17 = arith.maximumf %15, %16 : vector<8x1xf32>
    %18 = arith.divf %11, %17 : vector<8x1xf32>
    %cst_7 = arith.constant 1.000000e+00 : f32
    %19 = vector.broadcast %cst_7 : f32 to vector<8x1xf32>
    %20 = arith.subf %19, %18 : vector<8x1xf32>
    %cst_8 = arith.constant 9.99999996E-13 : f32
    %21 = vector.broadcast %cst_8 : f32 to vector<8x1xf32>
    %22 = arith.maximumf %15, %21 : vector<8x1xf32>
    %cst_9 = arith.constant 1.000000e+00 : f32
    %23 = vector.broadcast %cst_9 : f32 to vector<8x1xf32>
    %24 = arith.divf %23, %22 : vector<8x1xf32>
    %25 = vector.broadcast %24 : vector<8x1xf32> to vector<8x32xf32>
    %26 = arith.mulf %3, %25 : vector<8x32xf32>
    %27 = math.exp %26 : vector<8x32xf32>
    %cst_10 = arith.constant dense<0.000000e+00> : vector<8xf32>
    %28 = vector.multi_reduction <add>, %27, %cst_10 [1] : vector<8x32xf32> to vector<8xf32>
    %29 = vector.shape_cast %28 : vector<8xf32> to vector<8x1xf32>
    %30 = math.log %29 : vector<8x1xf32>
    %31 = arith.mulf %11, %24 : vector<8x1xf32>
    %32 = arith.subf %30, %31 : vector<8x1xf32>
    %cst_11 = arith.constant 0.000000e+00 : f32
    %33 = vector.broadcast %cst_11 : f32 to vector<8x1xf32>
    %34 = arith.subf %33, %32 : vector<8x1xf32>
    %35 = math.exp %34 : vector<8x1xf32>
    %cst_12 = arith.constant 1.000000e+00 : f32
    %36 = vector.broadcast %cst_12 : f32 to vector<8x1xf32>
    %37 = arith.subf %36, %35 : vector<8x1xf32>
    %cst_13 = arith.constant 1.000000e+00 : f32
    %38 = vector.broadcast %cst_13 : f32 to vector<8x1xf32>
    %39 = arith.mulf %38, %37 : vector<8x1xf32>
    %40 = arith.mulf %39, %37 : vector<8x1xf32>
    %cst_14 = arith.constant 1.000000e+00 : f32
    %41 = vector.broadcast %cst_14 : f32 to vector<8x1xf32>
    %42 = arith.mulf %41, %40 : vector<8x1xf32>
    %43 = arith.mulf %42, %32 : vector<8x1xf32>
    %c1_i32 = arith.constant 1 : i32
    %44 = arith.muli %arg0, %c1_i32 : i32
    %45 = arith.addi %44, %arg1 : i32
    %c8_i32 = arith.constant 8 : i32
    %46 = arith.muli %45, %c8_i32 : i32
    %47 = tpu.iota {dimensions = array<i32: 0>} : vector<8x1xi32>
    %48 = vector.broadcast %46 : i32 to vector<8x1xi32>
    %49 = arith.addi %48, %47 : vector<8x1xi32>
    %c8_i32_15 = arith.constant 8 : i32
    %50 = vector.broadcast %c8_i32_15 : i32 to vector<8x1xi32>
    %51 = arith.cmpi slt, %49, %50 : vector<8x1xi32>
    %cst_16 = arith.constant 1.000000e-01 : f32
    %52 = vector.broadcast %cst_16 : f32 to vector<8x1xf32>
    %53 = arith.mulf %52, %43 : vector<8x1xf32>
    %54 = arith.addf %20, %53 : vector<8x1xf32>
    %cst_17 = arith.constant 0.000000e+00 : f32
    %55 = vector.broadcast %cst_17 : f32 to vector<8x1xf32>
    %56 = arith.select %51, %54, %55 : vector<8x1xi1>, vector<8x1xf32>
    %c0_18 = arith.constant 0 : index
    %c0_19 = arith.constant 0 : index
    %57 = vector.load %arg5[%c0_18, %c0_19] : memref<1x1xf32, #tpu.memory_space<vmem>>, vector<1x1xf32>
    %cst_20 = arith.constant dense<0.000000e+00> : vector<1xf32>
    %58 = vector.multi_reduction <add>, %56, %cst_20 [0] : vector<8x1xf32> to vector<1xf32>
    %59 = vector.shape_cast %58 : vector<1xf32> to vector<1x1xf32>
    %60 = arith.addf %57, %59 : vector<1x1xf32>
    %c0_21 = arith.constant 0 : index
    %c0_22 = arith.constant 0 : index
    %61 = vector.load %arg5[%c0_21, %c0_22] : memref<1x1xf32, #tpu.memory_space<vmem>>, vector<1x1xf32>
    tpu.vector_store %arg5[%c0_21, %c0_22], %60 {strides = array<i32>} : memref<1x1xf32, #tpu.memory_space<vmem>>, vector<1x1xf32>,
    %c0_i32_23 = arith.constant 0 : i32
    %62 = arith.cmpi eq, %arg1, %c0_i32_23 : i32
    %63 = arith.extui %62 : i1 to i32
    %c0_i32_24 = arith.constant 0 : i32
    %64 = arith.cmpi ne, %63, %c0_i32_24 : i32
    scf.if %64 {
      %c0_25 = arith.constant 0 : index
      %c0_26 = arith.constant 0 : index
      %65 = vector.load %arg5[%c0_25, %c0_26] : memref<1x1xf32, #tpu.memory_space<vmem>>, vector<1x1xf32>
      %cst_27 = arith.constant 1.250000e-01 : f32
      %66 = vector.broadcast %cst_27 : f32 to vector<1x1xf32>
      %67 = arith.mulf %65, %66 : vector<1x1xf32>
      %68 = vector.shape_cast %67 : vector<1x1xf32> to vector<1x1xf32>
      %69 = vector.broadcast %68 : vector<1x1xf32> to vector<8x128xf32>
      %c0_28 = arith.constant 0 : index
      %c0_29 = arith.constant 0 : index
      %70 = vector.load %arg4[%c0_28, %c0_29] : memref<8x128xf32, #tpu.memory_space<vmem>>, vector<8x128xf32>
      tpu.vector_store %arg4[%c0_28, %c0_29], %69 {strides = array<i32>} : memref<8x128xf32, #tpu.memory_space<vmem>>, vector<8x128xf32>,
    } else {
    }
    return
  }
  func.func @transform_0(%arg0: i32, %arg1: i32) -> (i32, i32) {
    %c1_i32 = arith.constant 1 : i32
    %0 = arith.muli %arg0, %c1_i32 : i32
    %1 = arith.addi %0, %arg1 : i32
    %c0_i32 = arith.constant 0 : i32
    %2 = arith.minsi %1, %c0_i32 : i32
    %c0_i32_0 = arith.constant 0 : i32
    %c0_i32_1 = arith.constant 0 : i32
    return %2, %c0_i32_0 : i32, i32
  }
  func.func @transform_1(%arg0: i32, %arg1: i32) -> (i32, i32) {
    %c1_i32 = arith.constant 1 : i32
    %0 = arith.muli %arg0, %c1_i32 : i32
    %1 = arith.addi %0, %arg1 : i32
    %c0_i32 = arith.constant 0 : i32
    %2 = arith.minsi %1, %c0_i32 : i32
    %c0_i32_0 = arith.constant 0 : i32
    %c0_i32_1 = arith.constant 0 : i32
    return %2, %c0_i32_0 : i32, i32
  }
  func.func @transform_2(%arg0: i32, %arg1: i32) -> (i32, i32) {
    %c0_i32 = arith.constant 0 : i32
    %c0_i32_0 = arith.constant 0 : i32
    return %arg0, %c0_i32 : i32, i32
  }
}

</mosaic_0001>

<llo_original>
// kernel: tpu_custom_call.1
$region0: #{tpu_custom_call.1}
  #allocation0 [shape = 'u32[]', space=smem, size = 0x4, offset = 0x4, fixed_abs, tag = 'smem constant byte address 0x4 - core index']
  #allocation1 [shape = 'u32[72,128]{1,0:T(1,128)}', space=vmem, size = 0x9000, scoped, tag = 'internal scratch']
  #allocation2 [shape = 'f32[1,1]{1,0:T(1,128)}', space=vmem, size = 0x200, scoped, tag = 'scratch operand']
  %s0 = inlined_call_operand.vmem [shape: f32[8,32], index: 0, kind: input, shape index: {}]
  %s1 = inlined_call_operand.vmem [shape: s32[8,1], index: 1, kind: input, shape index: {}]
  %s2 = inlined_call_operand.hbm [shape: f32[8,128], index: 2, kind: output, shape index: {}]
  %s3 = sld [smem:[#allocation0]]
  $region26: #{tpu_custom_call.1} parent=0
    _
  %s5 = ssub.s32 1, %s3
  %s6 = scalar_select 0, %s5, %s3
  $region1: #{tpu_custom_call.1} parent=0
    #allocation3 [shape = 'u8[4096]{0}', space=vmem, size = 0x1000, scoped, tag = 'output window, operand 0, single buffered']
    #allocation4 [shape = 's32[1]{0}', space=sflag, size = 0x4, scoped, tag = 'scoped memory for tpu_custom_call.1']
    %7 = vsyncpa [#allocation4], 0
    // Predicated region
    $region2: #{tpu_custom_call.1} parent=1 // pred_check
      _
    $region3: #{tpu_custom_call.1} parent=1 // pred_check_branch
      %9 = sbr.rel (0) target = $region5
    $region4: #{tpu_custom_call.1} parent=1 // pred_region
      %s10 = sadd.s32 0, 0
      %p11 = scmp.lt.s32.totalorder %s10, 0
      %s12 = scalar_select %p11, %s10, 0
      %p13 = scmp.lt.s32.totalorder %s12, 0
      %s14 = scalar_select %p13, %s12, 0
      %s15 = smul.addr %s14, 8
      %s16 = scalar_lea.vmem %s0, %s15
      %s17 = sadd.s32 0, 0
      %p18 = scmp.lt.s32.totalorder %s17, 0
      %s19 = scalar_select %p18, %s17, 0
    $region5: #{tpu_custom_call.1} parent=1 // pred_fallthru
      _
    // Predicated region
    $region6: #{tpu_custom_call.1} parent=1 // pred_check
      _
    $region7: #{tpu_custom_call.1} parent=1 // pred_check_branch
      %21 = sbr.rel (0) target = $region9
    $region8: #{tpu_custom_call.1} parent=1 // pred_region
      %s22 = sadd.s32 0, 0
      %p23 = scmp.lt.s32.totalorder %s22, 0
      %s24 = scalar_select %p23, %s22, 0
      %p25 = scmp.lt.s32.totalorder %s24, 0
      %s26 = scalar_select %p25, %s24, 0
      %s27 = smul.addr %s26, 8
      %s28 = scalar_lea.vmem %s1, %s27
      %s29 = sadd.s32 0, 0
      %p30 = scmp.lt.s32.totalorder %s29, 0
      %s31 = scalar_select %p30, %s29, 0
    $region9: #{tpu_custom_call.1} parent=1 // pred_fallthru
      _
    %s32 = sadd.s32 0, 0
    %p33 = scmp.lt.s32.totalorder %s32, 0
    %s34 = scalar_select %p33, %s32, 0
    %p35 = scmp.lt.s32.totalorder %s34, 0
    %s36 = scalar_select %p35, %s34, 0
    %s37 = smul.addr %s36, 8
    %s38 = scalar_lea.vmem %s0, %s37
    %s39 = sadd.s32 0, 0
    %p40 = scmp.lt.s32.totalorder %s39, 0
    %s41 = scalar_select %p40, %s39, 0
    %p42 = scmp.lt.s32.totalorder %s41, 0
    %s43 = scalar_select %p42, %s41, 0
    %s44 = smul.addr %s43, 8
    %s45 = scalar_lea.vmem %s1, %s44
    %s46 = sadd.s32 0, 0
    %p47 = scmp.lt.s32.totalorder %s46, 0
    %s48 = scalar_select %p47, %s46, 0
    %p49 = scmp.lt.s32.totalorder %s48, 0
    %s50 = scalar_select %p49, %s48, 0
    %s51 = smul.addr %s50, 8
    %s52 = scalar_lea.vmem %s0, %s51
    %s53 = sadd.s32 0, 0
    %p54 = scmp.lt.s32.totalorder %s53, 0
    %s55 = scalar_select %p54, %s53, 0
    %s56 = sadd.s32 0, 0
    %p57 = scmp.lt.s32.totalorder %s56, 0
    %s58 = scalar_select %p57, %s56, 0
    %p59 = scmp.lt.s32.totalorder %s58, 0
    %s60 = scalar_select %p59, %s58, 0
    %s61 = smul.addr %s60, 8
    %s62 = scalar_lea.vmem %s1, %s61
    %s63 = sadd.s32 0, 0
    %p64 = scmp.lt.s32.totalorder %s63, 0
    %s65 = scalar_select %p64, %s63, 0
    %p66 = scmp.eq.s32.totalorder 0, 0
    // Predicated region
    $region10: #{tpu_custom_call.1} parent=1 // pred_check
      %p67 = pneg %p66
    $region11: #{tpu_custom_call.1} parent=1 // pred_check_branch
      %69 = sbr.rel (%p67) target = $region13
    $region12: #{tpu_custom_call.1} parent=1 // pred_region
      %vm70 = vcmask 0
      %71 = vst.msk [vmem:[#allocation2] sm:$0x1] %vm70, 0.0
    $region13: #{tpu_custom_call.1} parent=1 // pred_fallthru
      _
    %v72 = vld [vmem:[%s52] sm:$0xff]
    %v73 = vld [vmem:[%s62] sm:$0xff]
    %v74 = vlaneseq
    %v75 = vand.u32 %v74, 127
    %76 = vset.pattern.permute.xlu0 0
    %77 = vperm.xlu0 %76, %v73
    %v78 = vpop.permute.xlu0 %77
    %vm79 = vcmp.eq.s32.totalorder %v75, %v78
    %v80 = vsel %vm79, %v72, 0.0
    %vm81 = vcmask 261120
    %v82 = vsel %vm81, %v80, 0.0
    %83 = vadd.xlane.f32.xlu0 %v82
    %v84 = vpop.xlane.xlu0 %83
    %v85 = vmul.f32 %v72, %v72
    %v86 = vsel %vm81, %v85, 0.0
    %87 = vadd.xlane.f32.xlu0 %v86
    %v88 = vpop.xlane.xlu0 %87
    %v89 = vrsqrt.pop %v88
    %v90 = vmul.f32 %v89, %v88
    %v91 = vmul.f32 %v90, %v89
    %v92 = vmul.f32 0.5, %v91
    %v93 = vsub.f32 1.5, %v92
    %v94 = vmul.f32 %v89, %v93
    %v95 = vmul.f32 %v88, %v94
    %vm96 = vcmp.eq.f32.partialorder %v88, inf
    %v97 = vsel %vm96, %v88, %v95
    %vm98 = vcmp.eq.f32.partialorder %v88, 0.0
    %v99 = vand.u32 %v88, 2147483648
    %v100 = vsel %vm98, %v99, %v97
    %v101 = vmax.f32 %v100, 1e-08
    %v102 = vrcp.pop %v101
    %v103 = vmul.f32 %v101, %v102
    %v104 = vsub.f32 1.0, %v103
    %v105 = vmul.f32 %v102, %v104
    %v106 = vadd.f32 %v102, %v105
    %vm107 = vweird.f32 %v101
    %vm108 = vweird.f32 %v102
    %vm109 = vmor %vm107, %vm108
    %v110 = vsel %vm109, %v102, %v106
    %v111 = vand.u32 2147483647, %v101
    %vm112 = vcmp.eq.f32.partialorder %v111, 8.507059e+37
    %v113 = vand.u32 %v101, 2147483648
    %v114 = vor.u32 1.1754944e-38, %v113
    %v115 = vsel %vm112, %v114, %v110
    %v116 = vmul.f32 %v84, %v115
    %v117 = vsub.f32 1.0, %v116
    %v118 = vmax.f32 %v100, 1e-12
    %v119 = vrcp.pop %v118
    %v120 = vmul.f32 %v118, %v119
    %v121 = vsub.f32 1.0, %v120
    %v122 = vmul.f32 %v119, %v121
    %v123 = vadd.f32 %v119, %v122
    %vm124 = vweird.f32 %v118
    %vm125 = vweird.f32 %v119
    %vm126 = vmor %vm124, %vm125
    %v127 = vsel %vm126, %v119, %v123
    %v128 = vand.u32 2147483647, %v118
    %vm129 = vcmp.eq.f32.partialorder %v128, 8.507059e+37
    %v130 = vand.u32 %v118, 2147483648
    %v131 = vor.u32 1.1754944e-38, %v130
    %v132 = vsel %vm129, %v131, %v127
    %v133 = vmul.f32 1.0, %v132
    %v134 = vmul.f32 %v72, %v133
    %v135 = vmul.f32 %v134, 1.442695
    %v136 = vpow.pop %v135
    %v137 = vsel %vm81, %v136, 0.0
    %138 = vadd.xlane.f32.xlu0 %v137
    %v139 = vpop.xlane.xlu0 %138
    %v140 = vlog2.pop %v139
    %v141 = vmul.f32 %v140, 0.6931472
    %v142 = vmul.f32 %v84, %v133
    %v143 = vsub.f32 %v141, %v142
    %v144 = vsub.f32 0.0, %v143
    %v145 = vmul.f32 %v144, 1.442695
    %v146 = vpow.pop %v145
    %v147 = vsub.f32 1.0, %v146
    %v148 = vmul.f32 %v147, %v147
    %v149 = vmul.f32 %v148, %v143
    %s150 = sadd.s32 0, 0
    %s151 = smul.u32 %s150, 8
    %v152 = vlaneseq
    %v153 = vshrl.u32 %v152, 7
    %v154 = vstv %s151
    %v155 = vadd.s32 %v154, %v153
    %vm156 = vcmp.lt.s32.totalorder %v155, 8
    %v157 = vmul.f32 %v149, 0.1
    %v158 = vadd.f32 %v117, %v157
    %v159 = vsel %vm156, %v158, 0.0
    %v160 = vld [vmem:[#allocation2] sm:$0x1]
    %v161 = vrot.slane %v159, 4
    %v162 = vadd.f32 %v159, %v161
    %v163 = vrot.slane %v162, 2
    %v164 = vadd.f32 %v162, %v163
    %v165 = vrot.slane %v164, 1
    %v166 = vadd.f32 %v164, %v165
    %v167 = vadd.f32 %v160, %v166
    %vm168 = vcmask 0
    %169 = vst.msk [vmem:[#allocation2] sm:$0x1] %vm168, %v167
    // Predicated region
    $region14: #{tpu_custom_call.1} parent=1 // pred_check
      %p170 = pneg %p66
    $region15: #{tpu_custom_call.1} parent=1 // pred_check_branch
      %172 = sbr.rel (%p170) target = $region17
    $region16: #{tpu_custom_call.1} parent=1 // pred_region
      %v173 = vld [vmem:[#allocation2] sm:$0x1]
      %v174 = vmul.f32 %v173, 0.125
      %v176 = vperm.slane %v174, 0
      %177 = vset.pattern.permute.xlu0 0
      %178 = vperm.xlu0 %177, %v176
      %v179 = vpop.permute.xlu0 %178
      %181 = vst [vmem:[#allocation3] sm:$0xff] %v179
    $region17: #{tpu_custom_call.1} parent=1 // pred_fallthru
      _
    // Predicated region
    $region18: #{tpu_custom_call.1} parent=1 // pred_check
      _
    $region19: #{tpu_custom_call.1} parent=1 // pred_check_branch
      %183 = sbr.rel (0) target = $region21
    $region20: #{tpu_custom_call.1} parent=1 // pred_region
      %185 = vsyncadd [#allocation4], 0
      %s187 = sshll.u32 [#allocation3], 4
      %s188 = int_to_ptr.vmem [resolvable:$true] %s187
      %s189 = sshll.u32 %s2, 4
      %s190 = int_to_ptr.hbm [resolvable:$true] %s189
      %192 = dma.vmem_to_hbm [thread:$0]  %s188, 128, %s190, [#allocation4]
    $region21: #{tpu_custom_call.1} parent=1 // pred_fallthru
      _
    // Predicated region
    $region22: #{tpu_custom_call.1} parent=1 // pred_check
      _
    $region23: #{tpu_custom_call.1} parent=1 // pred_check_branch
      %194 = sbr.rel (0) target = $region25
    $region24: #{tpu_custom_call.1} parent=1 // pred_region
      %196 = dma.done [#allocation4], 128
    $region25: #{tpu_custom_call.1} parent=1 // pred_fallthru
      _
    %197 = vsyncpa [#allocation4], 1

</llo_original>
